<compile_context>
chip_gen: v7x
topology: tpu7x:2x2x1
jax: 0.10.0
libtpu: 0.0.40
codegen_flags: <defaults>
</compile_context>

<pallas_src>
import jax
import jax.numpy as jnp
from jax.experimental import pallas as pl
from jax.experimental.pallas import tpu as pltpu


def repeat_linear_kernel(x_ref, g_ref, wt_ref, b_ref, o_ref, acc_ref):
    # x_ref  : (tb, tk)  batch/K tile of flattened x, native dtype
    # g_ref  : (1,  tk)  tiled gate vector (broadcast over tb)
    # wt_ref : (tk, O)   tiled + 1/S-scaled transposed linear weight
    # b_ref  : (1,  O)   linear bias (f32)
    # o_ref  : (tb, O)   output tile (f32), same block across the K axis
    # acc_ref: (tb, O)   f32 scratch accumulator
    k = pl.program_id(1)

    @pl.when(k == 0)
    def _():
        acc_ref[...] = jnp.zeros_like(acc_ref)

    gated = jnp.maximum(g_ref[...] * x_ref[...], 0.0)        # VPU, lane-dense
    acc_ref[...] += jnp.dot(gated, wt_ref[...],               # MXU, K-contract
                            preferred_element_type=jnp.float32)

    @pl.when(k == pl.num_programs(1) - 1)
    def _():
        o_ref[...] = acc_ref[...] + b_ref[...]


def _choose_tiles(B, K, itemsize, budget_bytes):
    """Pick (tb, tk): sublane-aligned batch tile and lane-aligned K tile.

    Sized so the double-buffered x block (2 * tb * tk * itemsize) fits within
    budget_bytes.  Prefers a single K step (whole flattened row per block).
    """
    lane, sub = 128, 8
    k_pad = pl.cdiv(K, lane) * lane

    def max_tb(tk):
        return budget_bytes // max(2 * tk * itemsize, 1)

    tk = k_pad
    if max_tb(tk) < sub:
        # Row too large for a single block: split K (multiple of 128) so that
        # at least an 8-row batch tile still fits in the budget.
        tk = (budget_bytes // (2 * sub * itemsize) // lane) * lane
        tk = int(max(lane, min(tk, k_pad)))

    tb = int(max_tb(tk))
    tb = min(tb, max(sub, pl.cdiv(B, sub) * sub))   # no bigger than padded B
    tb = min(tb, 512)                                # MXU M saturates well below
    tb = max(sub, (tb // sub) * sub)                 # sublane-aligned
    return tb, tk


def repeat_linear(x, w, weight, bias):
    """x: (B, S, D); w: (D,); weight: (O, D); bias: (O,). Returns (B, O) f32."""
    B, S, D = x.shape
    O = weight.shape[0]
    K = S * D
    dtype = x.dtype
    itemsize = jnp.dtype(dtype).itemsize

    # Generation-aware VMEM sizing (v5e/v6e: 128 MiB, v7x: 64 MiB physical).
    try:
        cap = int(pltpu.get_tpu_info().vmem_capacity_bytes)
    except Exception:
        cap = 64 * 1024 * 1024
    budget = cap // 3                                   # double-buffered x block
    vmem_limit = int(min(cap * 3 // 4, cap - (8 << 20)))

    tb, tk = _choose_tiles(B, K, itemsize, budget)
    Bp = pl.cdiv(B, tb) * tb
    Kp = pl.cdiv(K, tk) * tk
    grid_b, grid_k = Bp // tb, Kp // tk

    # Flatten (S, D) -> lane-dense K axis (free: contiguous trailing dims).
    xf = x.reshape(B, K)
    if Bp != B or Kp != K:
        xf = jnp.pad(xf, ((0, Bp - B), (0, Kp - K)))    # zero pad: relu(0)=0

    # Tile the gate along K; fold the mean's 1/S into the tiled weight.
    gate = jnp.tile(w.reshape(1, D), (1, S))                        # (1, K)
    wt = jnp.tile(weight.T.astype(jnp.float32) / float(S), (S, 1))  # (K, O)
    if Kp != K:
        gate = jnp.pad(gate, ((0, 0), (0, Kp - K)))
        wt = jnp.pad(wt, ((0, Kp - K), (0, 0)))
    gate = gate.astype(dtype)        # gate in x.dtype (bf16 path stays bf16)
    wt = wt.astype(dtype)            # bf16 MXU operands when x is bf16
    b2 = bias.reshape(1, O).astype(jnp.float32)

    cost = pl.CostEstimate(
        flops=2 * B * K * O + 2 * B * K,
        transcendentals=0,
        bytes_accessed=(Bp * Kp * itemsize          # x read (dominant)
                        + Kp * itemsize             # gate
                        + Kp * O * itemsize         # tiled weight
                        + O * 4                     # bias
                        + Bp * O * 4),              # output
    )

    out = pl.pallas_call(
        repeat_linear_kernel,
        out_shape=jax.ShapeDtypeStruct((Bp, O), jnp.float32),
        grid=(grid_b, grid_k),                       # reduction (K) axis last
        in_specs=[
            pl.BlockSpec((tb, tk), lambda b, k: (b, k)),   # x tile
            pl.BlockSpec((1, tk), lambda b, k: (0, k)),    # gate slice
            pl.BlockSpec((tk, O), lambda b, k: (k, 0)),    # weight slice
            pl.BlockSpec((1, O), lambda b, k: (0, 0)),     # bias
        ],
        out_specs=pl.BlockSpec((tb, O), lambda b, k: (b, 0)),
        scratch_shapes=[pltpu.VMEM((tb, O), jnp.float32)],
        compiler_params=pltpu.CompilerParams(
            dimension_semantics=("parallel", "arbitrary"),
            vmem_limit_bytes=vmem_limit,
        ),
        cost_estimate=cost,
    )(xf, gate, wt, b2)

    return out[:B]


def repeat_linear_ref(x, w, weight, bias):
    gated = jnp.maximum(w[None, None, :] * x, 0.0)
    m = jnp.mean(gated, axis=1)
    return m @ weight.T + bias[None, :]


if __name__ == "__main__":
    # Small shapes consistent with the module: batch=2, seq=8, in_dim=32, out_dim=16
    B, S, D, O = 2, 8, 32, 16
    key = jax.random.PRNGKey(0)
    kx, kw, kW, kb = jax.random.split(key, 4)

    x = jax.random.normal(kx, (B, S, D), dtype=jnp.float32)

    # Deterministic parameter init (shapes from __init__):
    #   self.w = randn(in_dim); nn.Linear(in_dim, out_dim) -> weight (O, D), bias (O,)
    w = jax.random.normal(kw, (D,), dtype=jnp.float32)
    bound = 1.0 / (D ** 0.5)
    weight = jax.random.uniform(kW, (O, D), minval=-bound, maxval=bound,
                                dtype=jnp.float32)
    bias = jax.random.uniform(kb, (O,), minval=-bound, maxval=bound,
                              dtype=jnp.float32)

    out = repeat_linear(x, w, weight, bias)
    out = jax.block_until_ready(out)

    ref = repeat_linear_ref(x, w, weight, bias)
    assert out.shape == (B, O)
    assert jnp.allclose(out, ref, rtol=1e-5, atol=1e-5), "mismatch vs reference"

    print("KERNEL_OK")
</pallas_src>

<mosaic_0001>
module attributes {stable_mosaic.version = 11 : i64} {
  func.func @repeat_linear_kernel(%arg0: i32, %arg1: i32, %arg2: memref<8x256xf32, #tpu.memory_space<vmem>>, %arg3: memref<1x256xf32, #tpu.memory_space<vmem>>, %arg4: memref<256x16xf32, #tpu.memory_space<vmem>>, %arg5: memref<1x16xf32, #tpu.memory_space<vmem>>, %arg6: memref<8x16xf32, #tpu.memory_space<vmem>>, %arg7: memref<8x16xf32, #tpu.memory_space<vmem>>) attributes {dimension_semantics = [#tpu.dimension_semantics<parallel>, #tpu.dimension_semantics<arbitrary>], iteration_bounds = array<i64: 1, 1>, scalar_prefetch = 0 : i64, scratch_operands = 1 : i64, tpu.core_type = #tpu.core_type<tc>, window_params = [{transform_indices = @transform_0, window_bounds = array<i64: 8, 256>}, {transform_indices = @transform_1, window_bounds = array<i64: 1, 256>}, {transform_indices = @transform_2, window_bounds = array<i64: 256, 16>}, {pipeline_mode = #tpu.pipeline_mode<synchronous>, transform_indices = @transform_3, window_bounds = array<i64: 1, 16>}, {transform_indices = @transform_4, window_bounds = array<i64: 8, 16>}]} {
    %c0_i32 = arith.constant 0 : i32
    %0 = arith.cmpi eq, %arg1, %c0_i32 : i32
    %1 = arith.extui %0 : i1 to i32
    %c0_i32_0 = arith.constant 0 : i32
    %2 = arith.cmpi ne, %1, %c0_i32_0 : i32
    scf.if %2 {
      %cst_13 = arith.constant 0.000000e+00 : f32
      %17 = vector.broadcast %cst_13 : f32 to vector<8x16xf32>
      %c0_14 = arith.constant 0 : index
      %c0_15 = arith.constant 0 : index
      %18 = vector.load %arg7[%c0_14, %c0_15] : memref<8x16xf32, #tpu.memory_space<vmem>>, vector<8x16xf32>
      tpu.vector_store %arg7[%c0_14, %c0_15], %17 {strides = array<i32>} : memref<8x16xf32, #tpu.memory_space<vmem>>, vector<8x16xf32>,
    } else {
    }
    %c0 = arith.constant 0 : index
    %c0_1 = arith.constant 0 : index
    %3 = vector.load %arg3[%c0, %c0_1] : memref<1x256xf32, #tpu.memory_space<vmem>>, vector<1x256xf32>
    %c0_2 = arith.constant 0 : index
    %c0_3 = arith.constant 0 : index
    %4 = vector.load %arg2[%c0_2, %c0_3] : memref<8x256xf32, #tpu.memory_space<vmem>>, vector<8x256xf32>
    %5 = vector.broadcast %3 : vector<1x256xf32> to vector<8x256xf32>
    %6 = arith.mulf %5, %4 : vector<8x256xf32>
    %cst = arith.constant 0.000000e+00 : f32
    %7 = vector.broadcast %cst : f32 to vector<8x256xf32>
    %8 = arith.maximumf %6, %7 : vector<8x256xf32>
    %c0_4 = arith.constant 0 : index
    %c0_5 = arith.constant 0 : index
    %9 = vector.load %arg7[%c0_4, %c0_5] : memref<8x16xf32, #tpu.memory_space<vmem>>, vector<8x16xf32>
    %c0_6 = arith.constant 0 : index
    %c0_7 = arith.constant 0 : index
    %10 = vector.load %arg4[%c0_6, %c0_7] : memref<256x16xf32, #tpu.memory_space<vmem>>, vector<256x16xf32>
    %cst_8 = arith.constant dense<0.000000e+00> : vector<8x16xf32>
    %11 = tpu.matmul %8, %10, %cst_8 {dimension_numbers = #tpu.dot_dimension_numbers<[1], [0], [0], [1], [0, 0, 1, 1], [], []>} : vector<8x256xf32>, vector<256x16xf32>, vector<8x16xf32> -> vector<8x16xf32>
    %12 = arith.addf %9, %11 : vector<8x16xf32>
    %c0_9 = arith.constant 0 : index
    %c0_10 = arith.constant 0 : index
    %13 = vector.load %arg7[%c0_9, %c0_10] : memref<8x16xf32, #tpu.memory_space<vmem>>, vector<8x16xf32>
    tpu.vector_store %arg7[%c0_9, %c0_10], %12 {strides = array<i32>} : memref<8x16xf32, #tpu.memory_space<vmem>>, vector<8x16xf32>,
    %c0_i32_11 = arith.constant 0 : i32
    %14 = arith.cmpi eq, %arg1, %c0_i32_11 : i32
    %15 = arith.extui %14 : i1 to i32
    %c0_i32_12 = arith.constant 0 : i32
    %16 = arith.cmpi ne, %15, %c0_i32_12 : i32
    scf.if %16 {
      %c0_13 = arith.constant 0 : index
      %c0_14 = arith.constant 0 : index
      %17 = vector.load %arg7[%c0_13, %c0_14] : memref<8x16xf32, #tpu.memory_space<vmem>>, vector<8x16xf32>
      %c0_15 = arith.constant 0 : index
      %c0_16 = arith.constant 0 : index
      %18 = vector.load %arg5[%c0_15, %c0_16] : memref<1x16xf32, #tpu.memory_space<vmem>>, vector<1x16xf32>
      %19 = vector.broadcast %18 : vector<1x16xf32> to vector<8x16xf32>
      %20 = arith.addf %17, %19 : vector<8x16xf32>
      %c0_17 = arith.constant 0 : index
      %c0_18 = arith.constant 0 : index
      %21 = vector.load %arg6[%c0_17, %c0_18] : memref<8x16xf32, #tpu.memory_space<vmem>>, vector<8x16xf32>
      tpu.vector_store %arg6[%c0_17, %c0_18], %20 {strides = array<i32>} : memref<8x16xf32, #tpu.memory_space<vmem>>, vector<8x16xf32>,
    } else {
    }
    return
  }
  func.func @transform_0(%arg0: i32, %arg1: i32) -> (i32, i32) {
    %c0_i32 = arith.constant 0 : i32
    return %arg0, %arg1 : i32, i32
  }
  func.func @transform_1(%arg0: i32, %arg1: i32) -> (i32, i32) {
    %c0_i32 = arith.constant 0 : i32
    %c0_i32_0 = arith.constant 0 : i32
    return %c0_i32, %arg1 : i32, i32
  }
  func.func @transform_2(%arg0: i32, %arg1: i32) -> (i32, i32) {
    %c0_i32 = arith.constant 0 : i32
    %c0_i32_0 = arith.constant 0 : i32
    return %arg1, %c0_i32 : i32, i32
  }
  func.func @transform_3(%arg0: i32, %arg1: i32) -> (i32, i32) {
    %c0_i32 = arith.constant 0 : i32
    %c0_i32_0 = arith.constant 0 : i32
    %c0_i32_1 = arith.constant 0 : i32
    return %c0_i32, %c0_i32_0 : i32, i32
  }
  func.func @transform_4(%arg0: i32, %arg1: i32) -> (i32, i32) {
    %c0_i32 = arith.constant 0 : i32
    %c0_i32_0 = arith.constant 0 : i32
    return %arg0, %c0_i32 : i32, i32
  }
}

</mosaic_0001>

<llo_original>
// kernel: tpu_custom_call.1
$region0: #{tpu_custom_call.1}
  #allocation0 [shape = 'u32[]', space=smem, size = 0x4, offset = 0x4, fixed_abs, tag = 'smem constant byte address 0x4 - core index']
  #allocation1 [shape = 'u32[144,128]{1,0:T(1,128)}', space=vmem, size = 0x12000, scoped, tag = 'internal scratch']
  #allocation2 [shape = 'f32[8,16]{1,0:T(8,128)}', space=vmem, size = 0x1000, scoped, tag = 'scratch operand']
  %s0 = inlined_call_operand.vmem [shape: f32[8,256], index: 0, kind: input, shape index: {}]
  %s1 = inlined_call_operand.vmem [shape: f32[1,256], index: 1, kind: input, shape index: {}]
  %s2 = inlined_call_operand.vmem [shape: f32[256,16], index: 2, kind: input, shape index: {}]
  %s3 = inlined_call_operand.vmem [shape: f32[1,16], index: 3, kind: input, shape index: {}]
  %s4 = inlined_call_operand.hbm [shape: f32[8,16], index: 4, kind: output, shape index: {}]
  %s5 = sld [smem:[#allocation0]]
  $region34: #{tpu_custom_call.1} parent=0
    _
  %s7 = ssub.s32 1, %s5
  %s8 = scalar_select 0, %s7, %s5
  $region1: #{tpu_custom_call.1} parent=0
    #allocation3 [shape = 'u8[4096]{0}', space=vmem, size = 0x1000, scoped, tag = 'output window, operand 0, single buffered']
    #allocation4 [shape = 's32[1]{0}', space=sflag, size = 0x4, scoped, tag = 'scoped memory for tpu_custom_call.1']
    %9 = vsyncpa [#allocation4], 0
    // Predicated region
    $region2: #{tpu_custom_call.1} parent=1 // pred_check
      _
    $region3: #{tpu_custom_call.1} parent=1 // pred_check_branch
      %11 = sbr.rel (0) target = $region5
    $region4: #{tpu_custom_call.1} parent=1 // pred_region
      _
    $region5: #{tpu_custom_call.1} parent=1 // pred_fallthru
      _
    // Predicated region
    $region6: #{tpu_custom_call.1} parent=1 // pred_check
      _
    $region7: #{tpu_custom_call.1} parent=1 // pred_check_branch
      %13 = sbr.rel (0) target = $region9
    $region8: #{tpu_custom_call.1} parent=1 // pred_region
      _
    $region9: #{tpu_custom_call.1} parent=1 // pred_fallthru
      _
    // Predicated region
    $region10: #{tpu_custom_call.1} parent=1 // pred_check
      _
    $region11: #{tpu_custom_call.1} parent=1 // pred_check_branch
      %15 = sbr.rel (0) target = $region13
    $region12: #{tpu_custom_call.1} parent=1 // pred_region
      _
    $region13: #{tpu_custom_call.1} parent=1 // pred_fallthru
      _
    // Predicated region
    $region14: #{tpu_custom_call.1} parent=1 // pred_check
      _
    $region15: #{tpu_custom_call.1} parent=1 // pred_check_branch
      %17 = sbr.rel (0) target = $region17
    $region16: #{tpu_custom_call.1} parent=1 // pred_region
      _
    $region17: #{tpu_custom_call.1} parent=1 // pred_fallthru
      _
    %p18 = scmp.eq.s32.totalorder 0, 0
    // Predicated region
    $region18: #{tpu_custom_call.1} parent=1 // pred_check
      %p19 = pneg %p18
    $region19: #{tpu_custom_call.1} parent=1 // pred_check_branch
      %21 = sbr.rel (%p19) target = $region21
    $region20: #{tpu_custom_call.1} parent=1 // pred_region
      %vm22 = vcmask 130048
      %23 = vst.msk [vmem:[#allocation2] sm:$0xff] %vm22, 0.0
    $region21: #{tpu_custom_call.1} parent=1 // pred_fallthru
      _
    %v24 = vld [vmem:[%s1] sm:$0x3]
    %v25 = vld [vmem:[%s0] sm:$0xff]
    %v26 = vld [vmem:[%s0 + $0x8] sm:$0xff]
    %v28 = vlaneseq
    %v29 = vshrl.u32 %v28, 7
    %v30 = vsub.s32 0, %v29
    %v31 = vrot.slane %v24, %v30
    %v32 = vlaneseq
    %v33 = vshrl.u32 %v32, 7
    %v34 = vsub.s32 1, %v33
    %v35 = vrot.slane %v24, %v34
    %v38 = vmul.f32 %v31, %v25
    %v39 = vmul.f32 %v35, %v26
    %v40 = vmax.f32 %v38, 0.0
    %v41 = vmax.f32 %v39, 0.0
    %v42 = vld [vmem:[#allocation2] sm:$0xff]
    %v43 = vld [vmem:[%s2] sm:$0xff]
    %v44 = vld [vmem:[%s2 + $0x8] sm:$0xff]
    %v45 = vld [vmem:[%s2 + $0x10] sm:$0xff]
    %v46 = vld [vmem:[%s2 + $0x18] sm:$0xff]
    %v47 = vld [vmem:[%s2 + $0x20] sm:$0xff]
    %v48 = vld [vmem:[%s2 + $0x28] sm:$0xff]
    %v49 = vld [vmem:[%s2 + $0x30] sm:$0xff]
    %v50 = vld [vmem:[%s2 + $0x38] sm:$0xff]
    %v51 = vld [vmem:[%s2 + $0x40] sm:$0xff]
    %v52 = vld [vmem:[%s2 + $0x48] sm:$0xff]
    %v53 = vld [vmem:[%s2 + $0x50] sm:$0xff]
    %v54 = vld [vmem:[%s2 + $0x58] sm:$0xff]
    %v55 = vld [vmem:[%s2 + $0x60] sm:$0xff]
    %v56 = vld [vmem:[%s2 + $0x68] sm:$0xff]
    %v57 = vld [vmem:[%s2 + $0x70] sm:$0xff]
    %v58 = vld [vmem:[%s2 + $0x78] sm:$0xff]
    %v59 = vld [vmem:[%s2 + $0x80] sm:$0xff]
    %v60 = vld [vmem:[%s2 + $0x88] sm:$0xff]
    %v61 = vld [vmem:[%s2 + $0x90] sm:$0xff]
    %v62 = vld [vmem:[%s2 + $0x98] sm:$0xff]
    %v63 = vld [vmem:[%s2 + $0xa0] sm:$0xff]
    %v64 = vld [vmem:[%s2 + $0xa8] sm:$0xff]
    %v65 = vld [vmem:[%s2 + $0xb0] sm:$0xff]
    %v66 = vld [vmem:[%s2 + $0xb8] sm:$0xff]
    %v67 = vld [vmem:[%s2 + $0xc0] sm:$0xff]
    %v68 = vld [vmem:[%s2 + $0xc8] sm:$0xff]
    %v69 = vld [vmem:[%s2 + $0xd0] sm:$0xff]
    %v70 = vld [vmem:[%s2 + $0xd8] sm:$0xff]
    %v71 = vld [vmem:[%s2 + $0xe0] sm:$0xff]
    %v72 = vld [vmem:[%s2 + $0xe8] sm:$0xff]
    %v73 = vld [vmem:[%s2 + $0xf0] sm:$0xff]
    %v74 = vld [vmem:[%s2 + $0xf8] sm:$0xff]
    %75 = vmatprep.subr.mxu0 0.0
    %76 = vmatpush1.msra.mxu0 %v43
    %77 = vmatprep.subr.mxu0 0.0
    %78 = vmatpush1.msra.mxu0 %v44
    %79 = vmatprep.subr.mxu0 0.0
    %80 = vmatpush1.msra.mxu0 %v45
    %81 = vmatprep.subr.mxu0 0.0
    %82 = vmatpush1.msra.mxu0 %v46
    %83 = vmatprep.subr.mxu0 0.0
    %84 = vmatpush1.msra.mxu0 %v47
    %85 = vmatprep.subr.mxu0 0.0
    %86 = vmatpush1.msra.mxu0 %v48
    %87 = vmatprep.subr.mxu0 0.0
    %88 = vmatpush1.msra.mxu0 %v49
    %89 = vmatprep.subr.mxu0 0.0
    %90 = vmatpush1.msra.mxu0 %v50
    %91 = vmatprep.subr.mxu0 0.0
    %92 = vmatpush1.msra.mxu0 %v51
    %93 = vmatprep.subr.mxu0 0.0
    %94 = vmatpush1.msra.mxu0 %v52
    %95 = vmatprep.subr.mxu0 0.0
    %96 = vmatpush1.msra.mxu0 %v53
    %97 = vmatprep.subr.mxu0 0.0
    %98 = vmatpush1.msra.mxu0 %v54
    %99 = vmatprep.subr.mxu0 0.0
    %100 = vmatpush1.msra.mxu0 %v55
    %101 = vmatprep.subr.mxu0 0.0
    %102 = vmatpush1.msra.mxu0 %v56
    %103 = vmatprep.subr.mxu0 0.0
    %104 = vmatpush1.msra.mxu0 %v57
    %105 = vmatprep.subr.mxu0 0.0
    %106 = vmatpush1.msra.mxu0 %v58
    %107 = vmatprep.subr.mxu0 0.0
    %108 = vmatpush1.msra.mxu0 %v59
    %109 = vmatprep.subr.mxu0 0.0
    %110 = vmatpush1.msra.mxu0 %v60
    %111 = vmatprep.subr.mxu0 0.0
    %112 = vmatpush1.msra.mxu0 %v61
    %113 = vmatprep.subr.mxu0 0.0
    %114 = vmatpush1.msra.mxu0 %v62
    %115 = vmatprep.subr.mxu0 0.0
    %116 = vmatpush1.msra.mxu0 %v63
    %117 = vmatprep.subr.mxu0 0.0
    %118 = vmatpush1.msra.mxu0 %v64
    %119 = vmatprep.subr.mxu0 0.0
    %120 = vmatpush1.msra.mxu0 %v65
    %121 = vmatprep.subr.mxu0 0.0
    %122 = vmatpush1.msra.mxu0 %v66
    %123 = vmatprep.subr.mxu0 0.0
    %124 = vmatpush1.msra.mxu0 %v67
    %125 = vmatprep.subr.mxu0 0.0
    %126 = vmatpush1.msra.mxu0 %v68
    %127 = vmatprep.subr.mxu0 0.0
    %128 = vmatpush1.msra.mxu0 %v69
    %129 = vmatprep.subr.mxu0 0.0
    %130 = vmatpush1.msra.mxu0 %v70
    %131 = vmatprep.subr.mxu0 0.0
    %132 = vmatpush1.msra.mxu0 %v71
    %133 = vmatprep.subr.mxu0 0.0
    %134 = vmatpush1.msra.mxu0 %v72
    %135 = vmatprep.subr.mxu0 0.0
    %136 = vmatpush1.msra.mxu0 %v73
    %137 = vmatprep.subr.mxu0 0.0
    %138 = vmatpush1.msra.mxu0 %v74
    %139 = vmatprep.mubr.f32.mxu0 %v41
    %140 = vmatmul.mubr.f32.gmra.mrb[0].mxu0 %v40
    %v141 = vpop.f32.mrb[0].mxu0
    %v142 = vadd.f32 0.0, %v141
    %v143 = vpop.f32.mrb[0].mxu0
    %144 = vdwg.mxu0
    %v145 = vadd.f32 %v42, %v142
    %vm146 = vcmask 130048
    %147 = vst.msk [vmem:[#allocation2] sm:$0xff] %vm146, %v145
    // Predicated region
    $region22: #{tpu_custom_call.1} parent=1 // pred_check
      %p148 = pneg %p18
    $region23: #{tpu_custom_call.1} parent=1 // pred_check_branch
      %150 = sbr.rel (%p148) target = $region25
    $region24: #{tpu_custom_call.1} parent=1 // pred_region
      %v151 = vld [vmem:[#allocation2] sm:$0xff]
      %v152 = vld [vmem:[%s3] sm:$0x1]
      %v154 = vlaneseq
      %v155 = vshrl.u32 %v154, 7
      %v156 = vsub.s32 0, %v155
      %v157 = vrot.slane %v152, %v156
      %v159 = vadd.f32 %v151, %v157
      %160 = vst.msk [vmem:[#allocation3] sm:$0xff] %vm146, %v159
    $region25: #{tpu_custom_call.1} parent=1 // pred_fallthru
      _
    // Predicated region
    $region26: #{tpu_custom_call.1} parent=1 // pred_check
      _
    $region27: #{tpu_custom_call.1} parent=1 // pred_check_branch
      %162 = sbr.rel (0) target = $region29
    $region28: #{tpu_custom_call.1} parent=1 // pred_region
      %s164 = ssub.s32 128, 128
      %165 = vsyncadd [#allocation4], %s164
      %s167 = sshll.u32 [#allocation3], 4
      %s168 = int_to_ptr.vmem [resolvable:$true] %s167
      %170 = dma.vmem_to_hbm [thread:$0]  %s168, 128, %s4, [#allocation4]
    $region29: #{tpu_custom_call.1} parent=1 // pred_fallthru
      _
    // Predicated region
    $region30: #{tpu_custom_call.1} parent=1 // pred_check
      _
    $region31: #{tpu_custom_call.1} parent=1 // pred_check_branch
      %172 = sbr.rel (0) target = $region33
    $region32: #{tpu_custom_call.1} parent=1 // pred_region
      %173 = dma.done [#allocation4], 128
    $region33: #{tpu_custom_call.1} parent=1 // pred_fallthru
      _
    %174 = vsyncpa [#allocation4], 1

</llo_original>
